<compile_context>
chip_gen: v7x
topology: tpu7x:2x2x1
jax: 0.10.0
libtpu: 0.0.40
codegen_flags: <defaults>
</compile_context>

<pallas_src>
import functools

import jax
import jax.numpy as jnp
import numpy as np
from jax.experimental import pallas as pl
from jax.experimental.pallas import tpu as pltpu

NEG_SLOPE = 0.01       # PyTorch F.leaky_relu default negative_slope
NEG_BIG = -1e30        # additive/select mask for invalid conv positions
F_PAD = 128            # lane-padded fused filter dim (3 * num_filter -> 128)
OUT_PAD = 128          # lane-padded FC output dim


def _round_up(x, m):
    return (x + m - 1) // m * m


def text_cnn_kernel(x_ref, w_ref, b_ref, vlen_ref, fcw_ref, fcb_ref, out_ref,
                    *, t_chunk, n_chunks, tap_pad):
    """One batch tile of the fused Text_CNN forward.

    x_ref    : (TB, S_pad, E)        bf16  embedded tokens (zero padded)
    w_ref    : (fs_max, E, F_PAD)    bf16  fused / pre-transposed conv weights
    b_ref    : (1, F_PAD)            f32   fused conv bias (0 in padded lanes)
    vlen_ref : (1, F_PAD)            i32   valid conv positions per lane
    fcw_ref  : (F_PAD, OUT_PAD)      bf16  pre-transposed, zero-padded FC weight
    fcb_ref  : (1, OUT_PAD)          f32   zero-padded FC bias
    out_ref  : (TB, OUT_PAD)         f32
    """
    TB, _, E = x_ref.shape
    fs_max = w_ref.shape[0]
    Fp = b_ref.shape[1]
    load_rows = t_chunk + tap_pad            # aligned superset of the tap window

    bias = b_ref[...]                        # (1, Fp)
    vlen = vlen_ref[...]                     # (1, Fp)
    feat = jnp.full((TB, Fp), NEG_BIG, jnp.float32)

    # Stream the time axis in chunks with a running max (caps the f32
    # intermediate at TB*t_chunk*Fp*4 bytes).
    # TODO(synk): switch to lax.fori_loop for very long sequences (n_chunks
    # large) to keep the trace small.
    for c in range(n_chunks):
        p0 = c * t_chunk
        xc = x_ref[:, p0:p0 + load_rows, :]  # sublane-aligned VMEM load

        # im2col rebuilt in VMEM: per-tap shifted slice + accumulated MXU dot
        # (bf16 operands, f32 accumulation).  Taps beyond a branch's filter
        # size hit zero weights and contribute nothing.
        acc = jnp.zeros((TB * t_chunk, Fp), jnp.float32)
        for j in range(fs_max):
            xj = xc[:, j:j + t_chunk, :].reshape(TB * t_chunk, E)
            acc = acc + jnp.dot(xj, w_ref[j],
                                preferred_element_type=jnp.float32)

        y = acc + bias
        y = jnp.maximum(y, NEG_SLOPE * y)    # leaky_relu (one mul + one max)

        # Mask per-branch invalid positions, then max over this chunk.
        yb = y.reshape(TB, t_chunk, Fp)
        pos = jax.lax.broadcasted_iota(jnp.int32, (t_chunk, Fp), 0) + p0
        yb = jnp.where((pos < vlen)[None], yb, NEG_BIG)
        feat = jnp.maximum(feat, jnp.max(yb, axis=1))

    # Lane-dense FC in bf16 (padded rows/cols are zero -> contribute nothing).
    out = jnp.dot(feat.astype(jnp.bfloat16), fcw_ref[...],
                  preferred_element_type=jnp.float32)
    out_ref[...] = (out + fcb_ref[...]).astype(out_ref.dtype)


def prepare_params(params, filter_sizes=(2, 3, 4)):
    """One-time host-side fusion of the model constants (hoisted out of the
    jitted forward: no per-call table copies or .at[].set() chains)."""
    emb = np.asarray(params["embedding"], np.float32)           # (V, E)
    E = emb.shape[1]
    NF = params["w1"].shape[0]
    fc_w = np.asarray(params["fc_w"], np.float32)               # (OUT, 3*NF)
    fc_b = np.asarray(params["fc_b"], np.float32)
    OUT, F_total = fc_w.shape
    fs_max = max(filter_sizes)
    assert F_total <= F_PAD and OUT <= OUT_PAD

    Wf = np.zeros((fs_max, E, F_PAD), np.float32)
    bias = np.zeros((1, F_PAD), np.float32)
    for i, fs in enumerate(filter_sizes):
        lo = i * NF
        w = np.asarray(params[f"w{i + 1}"], np.float32)         # (NF, fs, E)
        Wf[:fs, :, lo:lo + NF] = np.transpose(w, (1, 2, 0))
        bias[0, lo:lo + NF] = np.asarray(params[f"b{i + 1}"], np.float32)

    fcw = np.zeros((F_PAD, OUT_PAD), np.float32)
    fcw[:F_total, :OUT] = fc_w.T
    fcb = np.zeros((1, OUT_PAD), np.float32)
    fcb[0, :OUT] = fc_b

    return {
        "emb_bf16": jnp.asarray(emb, jnp.bfloat16),
        "w_fused": jnp.asarray(Wf, jnp.bfloat16),
        "b_fused": jnp.asarray(bias, jnp.float32),
        "fcw": jnp.asarray(fcw, jnp.bfloat16),
        "fcb": jnp.asarray(fcb, jnp.float32),
    }


@functools.partial(jax.jit,
                   static_argnames=("filter_sizes", "num_filter", "out_dim",
                                    "chunk"))
def text_cnn_forward(token_ids, prep, filter_sizes=(2, 3, 4), num_filter=10,
                     out_dim=10, chunk=128):
    """token_ids: (B, S) int32.  prep: output of prepare_params (arrays only)."""
    emb = prep["emb_bf16"]
    _, E = emb.shape
    B, S = token_ids.shape
    fs_max, fs_min = max(filter_sizes), min(filter_sizes)
    NF = num_filter
    assert S >= fs_max, "sequence shorter than the largest filter"
    assert len(filter_sizes) * NF <= F_PAD and out_dim <= OUT_PAD

    # ---- time tiling (positions streamed in-kernel with a running max) ----
    L = S - fs_min + 1                                  # max positions any branch needs
    Tc = min(_round_up(L, 8), _round_up(chunk, 8))
    T_pad = _round_up(L, Tc)
    n_chunks = T_pad // Tc
    tap_pad = _round_up(max(fs_max - 1, 1), 8)          # aligned tap overhang
    S_pad = max(_round_up(S, 8), T_pad + tap_pad)

    # ---- batch tiling ----
    if B <= 8:
        TB = B                                          # single step, no padding waste
    else:
        TB = 64                                         # tuned default
        half = _round_up(-(-B // 2), 8)                 # >=2 grid steps: both v7x TCs busy
        per_row = 2 * 2 * S_pad * E + 4 * Tc * F_PAD    # dbl-buffered x + f32 chunk
        vmem_cap = max(8, (8 * 1024 * 1024 // per_row) // 8 * 8)
        TB = max(8, min(TB, half, vmem_cap))
    B_pad = _round_up(B, TB)

    # ---- embedding gather (XLA glue; NO im2col duplication) ----
    # TODO(synk): move this gather in-kernel (scalar-prefetch token ids with a
    # VMEM-resident table on v5e/v6e, HBM + DMA row-gather on v7x) to drop the
    # (B, S, E) HBM round trip entirely.
    x = jnp.take(emb, token_ids.astype(jnp.int32), axis=0)       # (B, S, E) bf16
    x = jnp.pad(x, ((0, B_pad - B), (0, S_pad - S), (0, 0)))      # zero pad

    # Per-lane valid conv length (trace-time numpy constant, zero XLA ops).
    vlen_np = np.full((1, F_PAD), T_pad, np.int32)   # padded lanes: always valid -> feat 0
    for i, fs in enumerate(filter_sizes):
        vlen_np[0, i * NF:(i + 1) * NF] = S - fs + 1
    vlen = jnp.asarray(vlen_np)

    kernel = functools.partial(text_cnn_kernel, t_chunk=Tc, n_chunks=n_chunks,
                               tap_pad=tap_pad)
    out = pl.pallas_call(
        kernel,
        out_shape=jax.ShapeDtypeStruct((B_pad, OUT_PAD), jnp.float32),
        grid_spec=pltpu.PrefetchScalarGridSpec(
            num_scalar_prefetch=0,
            grid=(B_pad // TB,),
            in_specs=[
                pl.BlockSpec((TB, S_pad, E), lambda i: (i, 0, 0)),      # activations
                pl.BlockSpec((fs_max, E, F_PAD), lambda i: (0, 0, 0)),  # fused conv W
                pl.BlockSpec((1, F_PAD), lambda i: (0, 0)),             # conv bias
                pl.BlockSpec((1, F_PAD), lambda i: (0, 0)),             # valid lengths
                pl.BlockSpec((F_PAD, OUT_PAD), lambda i: (0, 0)),       # fc W (bf16)
                pl.BlockSpec((1, OUT_PAD), lambda i: (0, 0)),           # fc b
            ],
            out_specs=pl.BlockSpec((TB, OUT_PAD), lambda i: (i, 0)),
        ),
        compiler_params=pltpu.CompilerParams(
            dimension_semantics=("parallel",),
            # TODO(synk): per-generation sweep (v5e can go much higher with
            # 128 MiB physical VMEM; v7x must stay well under 64 MiB).
            vmem_limit_bytes=32 * 1024 * 1024,
        ),
    )(x, prep["w_fused"], prep["b_fused"], vlen, prep["fcw"], prep["fcb"])

    return out[:B, :out_dim]


def init_params(key, vocab_size=1000, embedding_dim=16, num_filter=10,
                filter_sizes=(2, 3, 4), output_dim=10):
    ks = jax.random.split(key, 9)
    p = {}
    p["embedding"] = jax.random.normal(ks[0], (vocab_size, embedding_dim),
                                       jnp.float32)
    for i, fs in enumerate(filter_sizes, start=1):
        fan_in = 1 * fs * embedding_dim
        bound = 1.0 / np.sqrt(fan_in)
        p[f"w{i}"] = jax.random.uniform(ks[2 * i - 1],
                                        (num_filter, fs, embedding_dim),
                                        jnp.float32, -bound, bound)
        p[f"b{i}"] = jax.random.uniform(ks[2 * i], (num_filter,), jnp.float32,
                                        -bound, bound)
    in_features = len(filter_sizes) * num_filter
    bound = 1.0 / np.sqrt(in_features)
    p["fc_w"] = jax.random.uniform(ks[7], (output_dim, in_features),
                                   jnp.float32, -bound, bound)
    p["fc_b"] = jax.random.uniform(ks[8], (output_dim,), jnp.float32,
                                   -bound, bound)
    return p


def text_cnn_reference(token_ids, params, filter_sizes=(2, 3, 4),
                       matmul_dtype=jnp.float32):
    """Pure-JAX reference matching the PyTorch forward.  With
    matmul_dtype=bfloat16 it mirrors the kernel's matmul-operand casts."""
    emb = params["embedding"][token_ids].astype(matmul_dtype).astype(jnp.float32)
    B, S, E = emb.shape

    def branch(W, b):
        W = W.astype(matmul_dtype).astype(jnp.float32)
        F_, fs, _ = W.shape
        L = S - fs + 1
        acc = jnp.zeros((B, L, F_), jnp.float32) + b[None, None, :]
        for j in range(fs):
            acc = acc + jnp.einsum("ble,fe->blf", emb[:, j:j + L, :], W[:, j, :])
        acc = jnp.where(acc >= 0, acc, NEG_SLOPE * acc)
        return jnp.max(acc, axis=1)

    feats = [branch(params[f"w{i + 1}"], params[f"b{i + 1}"])
             for i in range(len(filter_sizes))]
    feat = jnp.concatenate(feats, axis=1)
    fcw = params["fc_w"]
    if matmul_dtype == jnp.bfloat16:           # mirror the kernel's bf16 FC
        feat = feat.astype(matmul_dtype).astype(jnp.float32)
        fcw = fcw.astype(matmul_dtype).astype(jnp.float32)
    return feat @ fcw.T + params["fc_b"]


if __name__ == "__main__":
    key = jax.random.PRNGKey(0)
    pkey, xkey = jax.random.split(key)

    VOCAB, E, NF, OUT = 1000, 16, 10, 10
    B, S = 2, 16
    FS = (2, 3, 4)

    params = init_params(pkey, vocab_size=VOCAB, embedding_dim=E,
                         num_filter=NF, filter_sizes=FS, output_dim=OUT)
    token_ids = jax.random.randint(xkey, (B, S), 0, VOCAB, dtype=jnp.int32)

    prep = prepare_params(params, filter_sizes=FS)   # one-time host-side fusion
    out = jax.block_until_ready(
        text_cnn_forward(token_ids, prep, filter_sizes=FS, num_filter=NF,
                         out_dim=OUT))
    assert out.shape == (B, OUT), out.shape

    # Tight check vs a reference that mirrors the kernel's bf16 matmul operands.
    ref_bf16 = jax.block_until_ready(
        text_cnn_reference(token_ids, params, filter_sizes=FS,
                           matmul_dtype=jnp.bfloat16))
    np.testing.assert_allclose(np.asarray(out), np.asarray(ref_bf16),
                               rtol=2e-3, atol=2e-3)

    # Loose check vs the exact f32 PyTorch-equivalent forward (bf16 rounding only).
    ref_f32 = jax.block_until_ready(
        text_cnn_reference(token_ids, params, filter_sizes=FS))
    np.testing.assert_allclose(np.asarray(out), np.asarray(ref_f32),
                               rtol=1e-1, atol=1e-1)

    print("KERNEL_OK")
</pallas_src>

<mosaic_0001>
module attributes {stable_mosaic.version = 11 : i64} {
  func.func @text_cnn_kernel(%arg0: i32, %arg1: memref<2x24x16xbf16, #tpu.memory_space<vmem>>, %arg2: memref<4x16x128xbf16, #tpu.memory_space<vmem>>, %arg3: memref<1x128xf32, #tpu.memory_space<vmem>>, %arg4: memref<1x128xi32, #tpu.memory_space<vmem>>, %arg5: memref<128x128xbf16, #tpu.memory_space<vmem>>, %arg6: memref<1x128xf32, #tpu.memory_space<vmem>>, %arg7: memref<2x128xf32, #tpu.memory_space<vmem>>) attributes {dimension_semantics = [#tpu.dimension_semantics<parallel>], iteration_bounds = array<i64: 1>, scalar_prefetch = 0 : i64, scratch_operands = 0 : i64, tpu.core_type = #tpu.core_type<tc>, window_params = [{transform_indices = @transform_0, window_bounds = array<i64: 2, 24, 16>}, {pipeline_mode = #tpu.pipeline_mode<synchronous>, transform_indices = @transform_1, window_bounds = array<i64: 4, 16, 128>}, {pipeline_mode = #tpu.pipeline_mode<synchronous>, transform_indices = @transform_2, window_bounds = array<i64: 1, 128>}, {pipeline_mode = #tpu.pipeline_mode<synchronous>, transform_indices = @transform_3, window_bounds = array<i64: 1, 128>}, {pipeline_mode = #tpu.pipeline_mode<synchronous>, transform_indices = @transform_4, window_bounds = array<i64: 128, 128>}, {pipeline_mode = #tpu.pipeline_mode<synchronous>, transform_indices = @transform_5, window_bounds = array<i64: 1, 128>}, {transform_indices = @transform_6, window_bounds = array<i64: 2, 128>}]} {
    %c0 = arith.constant 0 : index
    %c0_0 = arith.constant 0 : index
    %0 = vector.load %arg3[%c0, %c0_0] : memref<1x128xf32, #tpu.memory_space<vmem>>, vector<1x128xf32>
    %c0_1 = arith.constant 0 : index
    %c0_2 = arith.constant 0 : index
    %1 = vector.load %arg4[%c0_1, %c0_2] : memref<1x128xi32, #tpu.memory_space<vmem>>, vector<1x128xi32>
    %cst = arith.constant -1.000000e+30 : f32
    %2 = vector.broadcast %cst : f32 to vector<2x128xf32>
    %c0_3 = arith.constant 0 : index
    %c0_4 = arith.constant 0 : index
    %c0_5 = arith.constant 0 : index
    %3 = vector.load %arg1[%c0_3, %c0_4, %c0_5] : memref<2x24x16xbf16, #tpu.memory_space<vmem>>, vector<2x24x16xbf16>
    %cst_6 = arith.constant 0.000000e+00 : f32
    %4 = vector.broadcast %cst_6 : f32 to vector<32x128xf32>
    %5 = vector.extract_strided_slice %3 {offsets = [0, 0, 0], sizes = [2, 16, 16], strides = [1, 1, 1]} : vector<2x24x16xbf16> to vector<2x16x16xbf16>
    %6 = vector.shape_cast %5 : vector<2x16x16xbf16> to vector<32x16xbf16>
    %c0_7 = arith.constant 0 : index
    %c0_8 = arith.constant 0 : index
    %c0_9 = arith.constant 0 : index
    %7 = vector.load %arg2[%c0_7, %c0_8, %c0_9] : memref<4x16x128xbf16, #tpu.memory_space<vmem>>, vector<1x16x128xbf16>
    %8 = vector.shape_cast %7 : vector<1x16x128xbf16> to vector<16x128xbf16>
    %cst_10 = arith.constant dense<0.000000e+00> : vector<32x128xf32>
    %9 = tpu.matmul %6, %8, %cst_10 {dimension_numbers = #tpu.dot_dimension_numbers<[1], [0], [0], [1], [0, 0, 1, 1], [], []>} : vector<32x16xbf16>, vector<16x128xbf16>, vector<32x128xf32> -> vector<32x128xf32>
    %10 = arith.addf %4, %9 : vector<32x128xf32>
    %11 = vector.extract_strided_slice %3 {offsets = [0, 1, 0], sizes = [2, 16, 16], strides = [1, 1, 1]} : vector<2x24x16xbf16> to vector<2x16x16xbf16>
    %12 = vector.shape_cast %11 : vector<2x16x16xbf16> to vector<32x16xbf16>
    %c1 = arith.constant 1 : index
    %c0_11 = arith.constant 0 : index
    %c0_12 = arith.constant 0 : index
    %13 = vector.load %arg2[%c1, %c0_11, %c0_12] : memref<4x16x128xbf16, #tpu.memory_space<vmem>>, vector<1x16x128xbf16>
    %14 = vector.shape_cast %13 : vector<1x16x128xbf16> to vector<16x128xbf16>
    %cst_13 = arith.constant dense<0.000000e+00> : vector<32x128xf32>
    %15 = tpu.matmul %12, %14, %cst_13 {dimension_numbers = #tpu.dot_dimension_numbers<[1], [0], [0], [1], [0, 0, 1, 1], [], []>} : vector<32x16xbf16>, vector<16x128xbf16>, vector<32x128xf32> -> vector<32x128xf32>
    %16 = arith.addf %10, %15 : vector<32x128xf32>
    %17 = vector.extract_strided_slice %3 {offsets = [0, 2, 0], sizes = [2, 16, 16], strides = [1, 1, 1]} : vector<2x24x16xbf16> to vector<2x16x16xbf16>
    %18 = vector.shape_cast %17 : vector<2x16x16xbf16> to vector<32x16xbf16>
    %c2 = arith.constant 2 : index
    %c0_14 = arith.constant 0 : index
    %c0_15 = arith.constant 0 : index
    %19 = vector.load %arg2[%c2, %c0_14, %c0_15] : memref<4x16x128xbf16, #tpu.memory_space<vmem>>, vector<1x16x128xbf16>
    %20 = vector.shape_cast %19 : vector<1x16x128xbf16> to vector<16x128xbf16>
    %cst_16 = arith.constant dense<0.000000e+00> : vector<32x128xf32>
    %21 = tpu.matmul %18, %20, %cst_16 {dimension_numbers = #tpu.dot_dimension_numbers<[1], [0], [0], [1], [0, 0, 1, 1], [], []>} : vector<32x16xbf16>, vector<16x128xbf16>, vector<32x128xf32> -> vector<32x128xf32>
    %22 = arith.addf %16, %21 : vector<32x128xf32>
    %23 = vector.extract_strided_slice %3 {offsets = [0, 3, 0], sizes = [2, 16, 16], strides = [1, 1, 1]} : vector<2x24x16xbf16> to vector<2x16x16xbf16>
    %24 = vector.shape_cast %23 : vector<2x16x16xbf16> to vector<32x16xbf16>
    %c3 = arith.constant 3 : index
    %c0_17 = arith.constant 0 : index
    %c0_18 = arith.constant 0 : index
    %25 = vector.load %arg2[%c3, %c0_17, %c0_18] : memref<4x16x128xbf16, #tpu.memory_space<vmem>>, vector<1x16x128xbf16>
    %26 = vector.shape_cast %25 : vector<1x16x128xbf16> to vector<16x128xbf16>
    %cst_19 = arith.constant dense<0.000000e+00> : vector<32x128xf32>
    %27 = tpu.matmul %24, %26, %cst_19 {dimension_numbers = #tpu.dot_dimension_numbers<[1], [0], [0], [1], [0, 0, 1, 1], [], []>} : vector<32x16xbf16>, vector<16x128xbf16>, vector<32x128xf32> -> vector<32x128xf32>
    %28 = arith.addf %22, %27 : vector<32x128xf32>
    %29 = vector.broadcast %0 : vector<1x128xf32> to vector<32x128xf32>
    %30 = arith.addf %28, %29 : vector<32x128xf32>
    %cst_20 = arith.constant 0.00999999977 : f32
    %31 = vector.broadcast %cst_20 : f32 to vector<32x128xf32>
    %32 = arith.mulf %31, %30 : vector<32x128xf32>
    %33 = arith.maximumf %30, %32 : vector<32x128xf32>
    %34 = vector.shape_cast %33 : vector<32x128xf32> to vector<2x16x128xf32>
    %35 = tpu.iota {dimensions = array<i32: 0>} : vector<16x128xi32>
    %c0_i32 = arith.constant 0 : i32
    %36 = vector.broadcast %c0_i32 : i32 to vector<16x128xi32>
    %37 = arith.addi %35, %36 : vector<16x128xi32>
    %38 = vector.broadcast %1 : vector<1x128xi32> to vector<16x128xi32>
    %39 = arith.cmpi slt, %37, %38 : vector<16x128xi32>
    %40 = vector.shape_cast %39 : vector<16x128xi1> to vector<1x16x128xi1>
    %cst_21 = arith.constant -1.000000e+30 : f32
    %41 = vector.shape_cast %40 : vector<1x16x128xi1> to vector<1x16x128xi1>
    %42 = vector.broadcast %41 : vector<1x16x128xi1> to vector<2x16x128xi1>
    %43 = vector.broadcast %cst_21 : f32 to vector<2x16x128xf32>
    %44 = arith.select %42, %34, %43 : vector<2x16x128xi1>, vector<2x16x128xf32>
    %cst_22 = arith.constant dense<0xFF800000> : vector<2x128xf32>
    %45 = vector.multi_reduction <maximumf>, %44, %cst_22 [1] : vector<2x16x128xf32> to vector<2x128xf32>
    %46 = arith.maximumf %2, %45 : vector<2x128xf32>
    %47 = arith.truncf %46 : vector<2x128xf32> to vector<2x128xbf16>
    %c0_23 = arith.constant 0 : index
    %c0_24 = arith.constant 0 : index
    %48 = vector.load %arg5[%c0_23, %c0_24] : memref<128x128xbf16, #tpu.memory_space<vmem>>, vector<128x128xbf16>
    %cst_25 = arith.constant dense<0.000000e+00> : vector<2x128xf32>
    %49 = tpu.matmul %47, %48, %cst_25 {dimension_numbers = #tpu.dot_dimension_numbers<[1], [0], [0], [1], [0, 0, 1, 1], [], []>} : vector<2x128xbf16>, vector<128x128xbf16>, vector<2x128xf32> -> vector<2x128xf32>
    %c0_26 = arith.constant 0 : index
    %c0_27 = arith.constant 0 : index
    %50 = vector.load %arg6[%c0_26, %c0_27] : memref<1x128xf32, #tpu.memory_space<vmem>>, vector<1x128xf32>
    %51 = vector.broadcast %50 : vector<1x128xf32> to vector<2x128xf32>
    %52 = arith.addf %49, %51 : vector<2x128xf32>
    %c0_28 = arith.constant 0 : index
    %c0_29 = arith.constant 0 : index
    %53 = vector.load %arg7[%c0_28, %c0_29] : memref<2x128xf32, #tpu.memory_space<vmem>>, vector<2x128xf32>
    tpu.vector_store %arg7[%c0_28, %c0_29], %52 {strides = array<i32>} : memref<2x128xf32, #tpu.memory_space<vmem>>, vector<2x128xf32>,
    return
  }
  func.func @transform_0(%arg0: i32) -> (i32, i32, i32) {
    %c0_i32 = arith.constant 0 : i32
    %c0_i32_0 = arith.constant 0 : i32
    %c0_i32_1 = arith.constant 0 : i32
    return %arg0, %c0_i32, %c0_i32_0 : i32, i32, i32
  }
  func.func @transform_1(%arg0: i32) -> (i32, i32, i32) {
    %c0_i32 = arith.constant 0 : i32
    %c0_i32_0 = arith.constant 0 : i32
    %c0_i32_1 = arith.constant 0 : i32
    %c0_i32_2 = arith.constant 0 : i32
    return %c0_i32, %c0_i32_0, %c0_i32_1 : i32, i32, i32
  }
  func.func @transform_2(%arg0: i32) -> (i32, i32) {
    %c0_i32 = arith.constant 0 : i32
    %c0_i32_0 = arith.constant 0 : i32
    %c0_i32_1 = arith.constant 0 : i32
    return %c0_i32, %c0_i32_0 : i32, i32
  }
  func.func @transform_3(%arg0: i32) -> (i32, i32) {
    %c0_i32 = arith.constant 0 : i32
    %c0_i32_0 = arith.constant 0 : i32
    %c0_i32_1 = arith.constant 0 : i32
    return %c0_i32, %c0_i32_0 : i32, i32
  }
  func.func @transform_4(%arg0: i32) -> (i32, i32) {
    %c0_i32 = arith.constant 0 : i32
    %c0_i32_0 = arith.constant 0 : i32
    %c0_i32_1 = arith.constant 0 : i32
    return %c0_i32, %c0_i32_0 : i32, i32
  }
  func.func @transform_5(%arg0: i32) -> (i32, i32) {
    %c0_i32 = arith.constant 0 : i32
    %c0_i32_0 = arith.constant 0 : i32
    %c0_i32_1 = arith.constant 0 : i32
    return %c0_i32, %c0_i32_0 : i32, i32
  }
  func.func @transform_6(%arg0: i32) -> (i32, i32) {
    %c0_i32 = arith.constant 0 : i32
    %c0_i32_0 = arith.constant 0 : i32
    return %arg0, %c0_i32 : i32, i32
  }
}

</mosaic_0001>

<llo_original>
// kernel: text_cnn_forward.1
$region0: #{text_cnn_forward.1}
  #allocation0 [shape = 'u32[]', space=smem, size = 0x4, offset = 0x4, fixed_abs, tag = 'smem constant byte address 0x4 - core index']
  #allocation1 [shape = 'u32[144,128]{1,0:T(1,128)}', space=vmem, size = 0x12000, scoped, tag = 'internal scratch']
  %s0 = inlined_call_operand.vmem [shape: bf16[2,24,16], index: 0, kind: input, shape index: {}]
  %s1 = inlined_call_operand.vmem [shape: bf16[4,16,128], index: 1, kind: input, shape index: {}]
  %s2 = inlined_call_operand.vmem [shape: f32[1,128], index: 2, kind: input, shape index: {}]
  %s3 = inlined_call_operand.vmem [shape: s32[1,128], index: 3, kind: input, shape index: {}]
  %s4 = inlined_call_operand.vmem [shape: bf16[128,128], index: 4, kind: input, shape index: {}]
  %s5 = inlined_call_operand.vmem [shape: f32[1,128], index: 5, kind: input, shape index: {}]
  %s6 = inlined_call_operand.hbm [shape: f32[2,128], index: 6, kind: output, shape index: {}]
  %s7 = sld [smem:[#allocation0]]
  $region34: #{text_cnn_forward.1} parent=0
    _
  %s9 = ssub.s32 1, %s7
  %s10 = scalar_select 0, %s9, %s7
  $region1: #{text_cnn_forward.1} parent=0
    #allocation2 [shape = 'u8[1024]{0}', space=vmem, size = 0x400, scoped, tag = 'output window, operand 0, single buffered']
    #allocation3 [shape = 's32[1]{0}', space=sflag, size = 0x4, scoped, tag = 'scoped memory for text_cnn_forward.1']
    %11 = vsyncpa [#allocation3], 0
    // Predicated region
    $region2: #{text_cnn_forward.1} parent=1 // pred_check
      _
    $region3: #{text_cnn_forward.1} parent=1 // pred_check_branch
      %13 = sbr.rel (0) target = $region5
    $region4: #{text_cnn_forward.1} parent=1 // pred_region
      _
    $region5: #{text_cnn_forward.1} parent=1 // pred_fallthru
      _
    // Predicated region
    $region6: #{text_cnn_forward.1} parent=1 // pred_check
      _
    $region7: #{text_cnn_forward.1} parent=1 // pred_check_branch
      %15 = sbr.rel (0) target = $region9
    $region8: #{text_cnn_forward.1} parent=1 // pred_region
      _
    $region9: #{text_cnn_forward.1} parent=1 // pred_fallthru
      _
    // Predicated region
    $region10: #{text_cnn_forward.1} parent=1 // pred_check
      _
    $region11: #{text_cnn_forward.1} parent=1 // pred_check_branch
      %17 = sbr.rel (0) target = $region13
    $region12: #{text_cnn_forward.1} parent=1 // pred_region
      _
    $region13: #{text_cnn_forward.1} parent=1 // pred_fallthru
      _
    // Predicated region
    $region14: #{text_cnn_forward.1} parent=1 // pred_check
      _
    $region15: #{text_cnn_forward.1} parent=1 // pred_check_branch
      %19 = sbr.rel (0) target = $region17
    $region16: #{text_cnn_forward.1} parent=1 // pred_region
      _
    $region17: #{text_cnn_forward.1} parent=1 // pred_fallthru
      _
    // Predicated region
    $region18: #{text_cnn_forward.1} parent=1 // pred_check
      _
    $region19: #{text_cnn_forward.1} parent=1 // pred_check_branch
      %21 = sbr.rel (0) target = $region21
    $region20: #{text_cnn_forward.1} parent=1 // pred_region
      _
    $region21: #{text_cnn_forward.1} parent=1 // pred_fallthru
      _
    // Predicated region
    $region22: #{text_cnn_forward.1} parent=1 // pred_check
      _
    $region23: #{text_cnn_forward.1} parent=1 // pred_check_branch
      %23 = sbr.rel (0) target = $region25
    $region24: #{text_cnn_forward.1} parent=1 // pred_region
      _
    $region25: #{text_cnn_forward.1} parent=1 // pred_fallthru
      _
    %v25 = vld [vmem:[%s2] sm:$0x1]
    %v26 = vld [vmem:[%s3] sm:$0x1]
    %v27 = vld [vmem:[%s0] sm:$0xf]
    %v28 = vld [vmem:[%s0 + $0x4] sm:$0xf]
    %v29 = vld [vmem:[%s0 + $0x8] sm:$0xf]
    %v30 = vld [vmem:[%s0 + $0xc] sm:$0xf]
    %v31 = vld [vmem:[%s0 + $0x10] sm:$0xf]
    %v32 = vld [vmem:[%s0 + $0x14] sm:$0xf]
    %v33 = vld [vmem:[%s1] sm:$0xf]
    %v34 = vld [vmem:[%s1 + $0x4] sm:$0xf]
    %vm35 = vsmask.f32 3328
    %vm36 = vsmask.f32 7440
    %vm37 = vmor %vm35, %vm36
    %v39 = vshrl.u32 %v27, 16
    %v41 = vrot.slane %v39, 4
    %v42 = vshll.u32 %v27, 16
    %v44 = vrot.slane %v42, 5
    %v45 = vor.u32 %v41, %v44
    %v46 = vrot.slane %v45, 4
    %v48 = vshll.u32 %v28, 16
    %v50 = vrot.slane %v48, 5
    %v51 = vsel %vm37, %v46, %v50
    %v52 = vshrl.u32 %v28, 16
    %v54 = vrot.slane %v52, 4
    %v55 = vor.u32 %v54, %v50
    %v56 = vrot.slane %v55, 4
    %v58 = vshll.u32 %v29, 16
    %v60 = vrot.slane %v58, 5
    %v61 = vsel %vm37, %v56, %v60
    %v63 = vshrl.u32 %v30, 16
    %v65 = vrot.slane %v63, 4
    %v66 = vshll.u32 %v30, 16
    %v68 = vrot.slane %v66, 5
    %v69 = vor.u32 %v65, %v68
    %v70 = vrot.slane %v69, 4
    %v72 = vshll.u32 %v31, 16
    %v74 = vrot.slane %v72, 5
    %v75 = vsel %vm37, %v70, %v74
    %v76 = vshrl.u32 %v31, 16
    %v78 = vrot.slane %v76, 4
    %v79 = vor.u32 %v78, %v74
    %v80 = vrot.slane %v79, 4
    %v82 = vshll.u32 %v32, 16
    %v84 = vrot.slane %v82, 5
    %v85 = vsel %vm37, %v80, %v84
    %s86 = scalar_lea.vmem %s1, 8
    %v87 = vld [vmem:[%s86] sm:$0xf]
    %v88 = vld [vmem:[%s86 + $0x4] sm:$0xf]
    %v89 = vunpack.c.l.b16 %v51
    %v90 = vunpack.c.l.b16 %v61
    %v91 = vunpack.c.l.b16 %v75
    %v92 = vunpack.c.l.b16 %v85
    %v93 = vpack.c.b16 %v90, %v89
    %v94 = vpack.c.b16 %v92, %v91
    %v97 = vunpack.c.l.b16 %v87
    %v98 = vunpack.c.l.b16 %v88
    %v99 = vpack.c.b16 %v98, %v97
    %vm101 = vcmask 130048
    %v103 = vsel %vm101, %v93, 0
    %v106 = vsel %vm101, %v94, 0
    %108 = vmatprep.subr.bf16.mxu0 0
    %109 = vmatpush1.bf16.msra.mxu0 %v99
    %110 = vmatprep.subr.bf16.mxu0 0
    %111 = vmatpush1.bf16.msra.mxu0 0
    %112 = vmatprep.subr.bf16.mxu0 0
    %113 = vmatpush1.bf16.msra.mxu0 0
    %114 = vmatprep.subr.bf16.mxu0 0
    %115 = vmatpush1.bf16.msra.mxu0 0
    %116 = vmatprep.subr.bf16.mxu0 0
    %117 = vmatpush1.bf16.msra.mxu0 0
    %118 = vmatprep.subr.bf16.mxu0 0
    %119 = vmatpush1.bf16.msra.mxu0 0
    %120 = vmatprep.subr.bf16.mxu0 0
    %121 = vmatpush1.bf16.msra.mxu0 0
    %122 = vmatprep.subr.bf16.mxu0 0
    %123 = vmatpush1.bf16.msra.mxu0 0
    %124 = vmatprep.subr.bf16.mxu0 0
    %125 = vmatpush1.bf16.msra.mxu0 0
    %126 = vmatprep.subr.bf16.mxu0 0
    %127 = vmatpush1.bf16.msra.mxu0 0
    %128 = vmatprep.subr.bf16.mxu0 0
    %129 = vmatpush1.bf16.msra.mxu0 0
    %130 = vmatprep.subr.bf16.mxu0 0
    %131 = vmatpush1.bf16.msra.mxu0 0
    %132 = vmatprep.subr.bf16.mxu0 0
    %133 = vmatpush1.bf16.msra.mxu0 0
    %134 = vmatprep.subr.bf16.mxu0 0
    %135 = vmatpush1.bf16.msra.mxu0 0
    %136 = vmatprep.subr.bf16.mxu0 0
    %137 = vmatpush1.bf16.msra.mxu0 0
    %138 = vmatprep.subr.bf16.mxu0 0
    %139 = vmatpush1.bf16.msra.mxu0 0
    %140 = vmatprep.mubr.bf16.mxu0 0
    %141 = vmatmul.mubr.bf16.gmra.mrb[0].mxu0 %v103
    %v142 = vpop.f32.mrb[0].mxu0
    %v143 = vadd.f32 0.0, %v142
    %v144 = vpop.f32.mrb[0].mxu0
    %v145 = vpop.f32.mrb[0].mxu0
    %v146 = vadd.f32 0.0, %v145
    %v147 = vpop.f32.mrb[0].mxu0
    %148 = vmatprep.mubr.bf16.mxu0 0
    %149 = vmatmul.mubr.bf16.gmra.mrb[0].mxu0 %v106
    %v150 = vpop.f32.mrb[0].mxu0
    %v151 = vadd.f32 0.0, %v150
    %v152 = vpop.f32.mrb[0].mxu0
    %v153 = vpop.f32.mrb[0].mxu0
    %v154 = vadd.f32 0.0, %v153
    %v155 = vpop.f32.mrb[0].mxu0
    %156 = vdwg.mxu0
    %v161 = vunpack.c.l.b16 %v27
    %v162 = vunpack.c.l.b16 %v28
    %v163 = vunpack.c.l.b16 %v30
    %v164 = vunpack.c.l.b16 %v31
    %v165 = vpack.c.b16 %v162, %v161
    %v166 = vpack.c.b16 %v164, %v163
    %v169 = vunpack.c.l.b16 %v33
    %v170 = vunpack.c.l.b16 %v34
    %v171 = vpack.c.b16 %v170, %v169
    %v174 = vsel %vm101, %v165, 0
    %v177 = vsel %vm101, %v166, 0
    %179 = vmatprep.subr.bf16.mxu0 0
    %180 = vmatpush1.bf16.msra.mxu0 %v171
    %181 = vmatprep.subr.bf16.mxu0 0
    %182 = vmatpush1.bf16.msra.mxu0 0
    %183 = vmatprep.subr.bf16.mxu0 0
    %184 = vmatpush1.bf16.msra.mxu0 0
    %185 = vmatprep.subr.bf16.mxu0 0
    %186 = vmatpush1.bf16.msra.mxu0 0
    %187 = vmatprep.subr.bf16.mxu0 0
    %188 = vmatpush1.bf16.msra.mxu0 0
    %189 = vmatprep.subr.bf16.mxu0 0
    %190 = vmatpush1.bf16.msra.mxu0 0
    %191 = vmatprep.subr.bf16.mxu0 0
    %192 = vmatpush1.bf16.msra.mxu0 0
    %193 = vmatprep.subr.bf16.mxu0 0
    %194 = vmatpush1.bf16.msra.mxu0 0
    %195 = vmatprep.subr.bf16.mxu0 0
    %196 = vmatpush1.bf16.msra.mxu0 0
    %197 = vmatprep.subr.bf16.mxu0 0
    %198 = vmatpush1.bf16.msra.mxu0 0
    %199 = vmatprep.subr.bf16.mxu0 0
    %200 = vmatpush1.bf16.msra.mxu0 0
    %201 = vmatprep.subr.bf16.mxu0 0
    %202 = vmatpush1.bf16.msra.mxu0 0
    %203 = vmatprep.subr.bf16.mxu0 0
    %204 = vmatpush1.bf16.msra.mxu0 0
    %205 = vmatprep.subr.bf16.mxu0 0
    %206 = vmatpush1.bf16.msra.mxu0 0
    %207 = vmatprep.subr.bf16.mxu0 0
    %208 = vmatpush1.bf16.msra.mxu0 0
    %209 = vmatprep.subr.bf16.mxu0 0
    %210 = vmatpush1.bf16.msra.mxu0 0
    %211 = vmatprep.mubr.bf16.mxu0 0
    %212 = vmatmul.mubr.bf16.gmra.mrb[0].mxu0 %v174
    %v213 = vpop.f32.mrb[0].mxu0
    %v214 = vadd.f32 %v143, %v213
    %v215 = vpop.f32.mrb[0].mxu0
    %v216 = vpop.f32.mrb[0].mxu0
    %v217 = vadd.f32 %v146, %v216
    %v218 = vpop.f32.mrb[0].mxu0
    %219 = vmatprep.mubr.bf16.mxu0 0
    %220 = vmatmul.mubr.bf16.gmra.mrb[0].mxu0 %v177
    %v221 = vpop.f32.mrb[0].mxu0
    %v222 = vadd.f32 %v151, %v221
    %v223 = vpop.f32.mrb[0].mxu0
    %v224 = vpop.f32.mrb[0].mxu0
    %v225 = vadd.f32 %v154, %v224
    %v226 = vpop.f32.mrb[0].mxu0
    %227 = vdwg.mxu0
    %vm230 = vcmask 1042432
    %vm231 = vcmask 1046532
    %vm232 = vmor %vm230, %vm231
    %v233 = vrot.slane %v27, 5
    %v234 = vrot.slane %v233, 4
    %v235 = vrot.slane %v28, 5
    %v236 = vsel %vm232, %v234, %v235
    %v237 = vrot.slane %v235, 4
    %v238 = vrot.slane %v29, 5
    %v239 = vsel %vm232, %v237, %v238
    %v240 = vrot.slane %v30, 5
    %v241 = vrot.slane %v240, 4
    %v242 = vrot.slane %v31, 5
    %v243 = vsel %vm232, %v241, %v242
    %v244 = vrot.slane %v242, 4
    %v245 = vrot.slane %v32, 5
    %v246 = vsel %vm232, %v244, %v245
    %s247 = scalar_lea.vmem %s1, 16
    %v248 = vld [vmem:[%s247] sm:$0xf]
    %v249 = vld [vmem:[%s247 + $0x4] sm:$0xf]
    %v250 = vunpack.c.l.b16 %v236
    %v251 = vunpack.c.l.b16 %v239
    %v252 = vunpack.c.l.b16 %v243
    %v253 = vunpack.c.l.b16 %v246
    %v254 = vpack.c.b16 %v251, %v250
    %v255 = vpack.c.b16 %v253, %v252
    %v258 = vunpack.c.l.b16 %v248
    %v259 = vunpack.c.l.b16 %v249
    %v260 = vpack.c.b16 %v259, %v258
    %v263 = vsel %vm101, %v254, 0
    %v266 = vsel %vm101, %v255, 0
    %268 = vmatprep.subr.bf16.mxu0 0
    %269 = vmatpush1.bf16.msra.mxu0 %v260
    %270 = vmatprep.subr.bf16.mxu0 0
    %271 = vmatpush1.bf16.msra.mxu0 0
    %272 = vmatprep.subr.bf16.mxu0 0
    %273 = vmatpush1.bf16.msra.mxu0 0
    %274 = vmatprep.subr.bf16.mxu0 0
    %275 = vmatpush1.bf16.msra.mxu0 0
    %276 = vmatprep.subr.bf16.mxu0 0
    %277 = vmatpush1.bf16.msra.mxu0 0
    %278 = vmatprep.subr.bf16.mxu0 0
    %279 = vmatpush1.bf16.msra.mxu0 0
    %280 = vmatprep.subr.bf16.mxu0 0
    %281 = vmatpush1.bf16.msra.mxu0 0
    %282 = vmatprep.subr.bf16.mxu0 0
    %283 = vmatpush1.bf16.msra.mxu0 0
    %284 = vmatprep.subr.bf16.mxu0 0
    %285 = vmatpush1.bf16.msra.mxu0 0
    %286 = vmatprep.subr.bf16.mxu0 0
    %287 = vmatpush1.bf16.msra.mxu0 0
    %288 = vmatprep.subr.bf16.mxu0 0
    %289 = vmatpush1.bf16.msra.mxu0 0
    %290 = vmatprep.subr.bf16.mxu0 0
    %291 = vmatpush1.bf16.msra.mxu0 0
    %292 = vmatprep.subr.bf16.mxu0 0
    %293 = vmatpush1.bf16.msra.mxu0 0
    %294 = vmatprep.subr.bf16.mxu0 0
    %295 = vmatpush1.bf16.msra.mxu0 0
    %296 = vmatprep.subr.bf16.mxu0 0
    %297 = vmatpush1.bf16.msra.mxu0 0
    %298 = vmatprep.subr.bf16.mxu0 0
    %299 = vmatpush1.bf16.msra.mxu0 0
    %300 = vmatprep.mubr.bf16.mxu0 0
    %301 = vmatmul.mubr.bf16.gmra.mrb[0].mxu0 %v263
    %v302 = vpop.f32.mrb[0].mxu0
    %v303 = vadd.f32 0.0, %v302
    %v304 = vpop.f32.mrb[0].mxu0
    %v305 = vpop.f32.mrb[0].mxu0
    %v306 = vadd.f32 0.0, %v305
    %v307 = vpop.f32.mrb[0].mxu0
    %308 = vmatprep.mubr.bf16.mxu0 0
    %309 = vmatmul.mubr.bf16.gmra.mrb[0].mxu0 %v266
    %v310 = vpop.f32.mrb[0].mxu0
    %v311 = vadd.f32 0.0, %v310
    %v312 = vpop.f32.mrb[0].mxu0
    %v313 = vpop.f32.mrb[0].mxu0
    %v314 = vadd.f32 0.0, %v313
    %v315 = vpop.f32.mrb[0].mxu0
    %316 = vdwg.mxu0
    %v317 = vadd.f32 %v214, %v303
    %v318 = vadd.f32 %v217, %v306
    %v319 = vadd.f32 %v222, %v311
    %v320 = vadd.f32 %v225, %v314
    %vm321 = vsmask.f32 2304
    %vm322 = vsmask.f32 6416
    %vm323 = vmor %vm321, %vm322
    %v324 = vrot.slane %v39, 5
    %v325 = vrot.slane %v42, 6
    %v326 = vor.u32 %v324, %v325
    %v327 = vrot.slane %v326, 4
    %v328 = vrot.slane %v52, 5
    %v329 = vrot.slane %v48, 6
    %v330 = vor.u32 %v328, %v329
    %v331 = vsel %vm323, %v327, %v330
    %v332 = vrot.slane %v330, 4
    %v333 = vshrl.u32 %v29, 16
    %v335 = vrot.slane %v333, 5
    %v336 = vrot.slane %v58, 6
    %v337 = vor.u32 %v335, %v336
    %v338 = vsel %vm323, %v332, %v337
    %v339 = vrot.slane %v63, 5
    %v340 = vrot.slane %v66, 6
    %v341 = vor.u32 %v339, %v340
    %v342 = vrot.slane %v341, 4
    %v343 = vrot.slane %v76, 5
    %v344 = vrot.slane %v72, 6
    %v345 = vor.u32 %v343, %v344
    %v346 = vsel %vm323, %v342, %v345
    %v347 = vrot.slane %v345, 4
    %v348 = vshrl.u32 %v32, 16
    %v350 = vrot.slane %v348, 5
    %v351 = vrot.slane %v82, 6
    %v352 = vor.u32 %v350, %v351
    %v353 = vsel %vm323, %v347, %v352
    %s354 = scalar_lea.vmem %s1, 24
    %v355 = vld [vmem:[%s354] sm:$0xf]
    %v356 = vld [vmem:[%s354 + $0x4] sm:$0xf]
    %v357 = vunpack.c.l.b16 %v331
    %v358 = vunpack.c.l.b16 %v338
    %v359 = vunpack.c.l.b16 %v346
    %v360 = vunpack.c.l.b16 %v353
    %v361 = vpack.c.b16 %v358, %v357
    %v362 = vpack.c.b16 %v360, %v359
    %v365 = vunpack.c.l.b16 %v355
    %v366 = vunpack.c.l.b16 %v356
    %v367 = vpack.c.b16 %v366, %v365
    %v370 = vsel %vm101, %v361, 0
    %v373 = vsel %vm101, %v362, 0
    %375 = vmatprep.subr.bf16.mxu0 0
    %376 = vmatpush1.bf16.msra.mxu0 %v367
    %377 = vmatprep.subr.bf16.mxu0 0
    %378 = vmatpush1.bf16.msra.mxu0 0
    %379 = vmatprep.subr.bf16.mxu0 0
    %380 = vmatpush1.bf16.msra.mxu0 0
    %381 = vmatprep.subr.bf16.mxu0 0
    %382 = vmatpush1.bf16.msra.mxu0 0
    %383 = vmatprep.subr.bf16.mxu0 0
    %384 = vmatpush1.bf16.msra.mxu0 0
    %385 = vmatprep.subr.bf16.mxu0 0
    %386 = vmatpush1.bf16.msra.mxu0 0
    %387 = vmatprep.subr.bf16.mxu0 0
    %388 = vmatpush1.bf16.msra.mxu0 0
    %389 = vmatprep.subr.bf16.mxu0 0
    %390 = vmatpush1.bf16.msra.mxu0 0
    %391 = vmatprep.subr.bf16.mxu0 0
    %392 = vmatpush1.bf16.msra.mxu0 0
    %393 = vmatprep.subr.bf16.mxu0 0
    %394 = vmatpush1.bf16.msra.mxu0 0
    %395 = vmatprep.subr.bf16.mxu0 0
    %396 = vmatpush1.bf16.msra.mxu0 0
    %397 = vmatprep.subr.bf16.mxu0 0
    %398 = vmatpush1.bf16.msra.mxu0 0
    %399 = vmatprep.subr.bf16.mxu0 0
    %400 = vmatpush1.bf16.msra.mxu0 0
    %401 = vmatprep.subr.bf16.mxu0 0
    %402 = vmatpush1.bf16.msra.mxu0 0
    %403 = vmatprep.subr.bf16.mxu0 0
    %404 = vmatpush1.bf16.msra.mxu0 0
    %405 = vmatprep.subr.bf16.mxu0 0
    %406 = vmatpush1.bf16.msra.mxu0 0
    %407 = vmatprep.mubr.bf16.mxu0 0
    %408 = vmatmul.mubr.bf16.gmra.mrb[0].mxu0 %v370
    %v409 = vpop.f32.mrb[0].mxu0
    %v410 = vadd.f32 0.0, %v409
    %v411 = vpop.f32.mrb[0].mxu0
    %v412 = vpop.f32.mrb[0].mxu0
    %v413 = vadd.f32 0.0, %v412
    %v414 = vpop.f32.mrb[0].mxu0
    %415 = vmatprep.mubr.bf16.mxu0 0
    %416 = vmatmul.mubr.bf16.gmra.mrb[0].mxu0 %v373
    %v417 = vpop.f32.mrb[0].mxu0
    %v418 = vadd.f32 0.0, %v417
    %v419 = vpop.f32.mrb[0].mxu0
    %v420 = vpop.f32.mrb[0].mxu0
    %v421 = vadd.f32 0.0, %v420
    %v422 = vpop.f32.mrb[0].mxu0
    %423 = vdwg.mxu0
    %v424 = vadd.f32 %v317, %v410
    %v425 = vadd.f32 %v318, %v413
    %v426 = vadd.f32 %v319, %v418
    %v427 = vadd.f32 %v320, %v421
    %v429 = vlaneseq
    %v430 = vshrl.u32 %v429, 7
    %v431 = vsub.s32 0, %v430
    %v432 = vrot.slane %v25, %v431
    %v434 = vadd.f32 %v424, %v432
    %v435 = vadd.f32 %v425, %v432
    %v436 = vadd.f32 %v426, %v432
    %v437 = vadd.f32 %v427, %v432
    %v438 = vmul.f32 %v434, 0.01
    %v439 = vmul.f32 %v435, 0.01
    %v440 = vmul.f32 %v436, 0.01
    %v441 = vmul.f32 %v437, 0.01
    %v442 = vmax.f32 %v434, %v438
    %v443 = vmax.f32 %v435, %v439
    %v444 = vmax.f32 %v436, %v440
    %v445 = vmax.f32 %v437, %v441
    %v446 = vlaneseq
    %v447 = vshrl.u32 %v446, 7
    %v448 = vadd.s32 %v447, 8
    %v449 = vlaneseq
    %v450 = vshrl.u32 %v449, 7
    %v451 = vsub.s32 0, %v450
    %v452 = vrot.slane %v26, %v451
    %vm453 = vcmp.lt.s32.totalorder %v447, %v452
    %vm454 = vcmp.lt.s32.totalorder %v448, %v452
    %v455 = vsel %vm453, 1, 0
    %v456 = vsel %vm454, 1, 0
    %vm457 = vcmp.eq.s32.totalorder %v455, 1
    %vm458 = vcmp.eq.s32.totalorder %v456, 1
    %v459 = vsel %vm457, %v442, -1e+30
    %v460 = vsel %vm458, %v443, -1e+30
    %v461 = vsel %vm457, %v444, -1e+30
    %v462 = vsel %vm458, %v445, -1e+30
    %v463 = vmax.f32 %v459, %v460
    %v464 = vrot.slane %v463, 4
    %v465 = vmax.f32 %v463, %v464
    %v466 = vrot.slane %v465, 2
    %v467 = vmax.f32 %v465, %v466
    %v468 = vrot.slane %v467, 1
    %v469 = vmax.f32 %v467, %v468
    %v470 = vmax.f32 %v461, %v462
    %v471 = vrot.slane %v470, 4
    %v472 = vmax.f32 %v470, %v471
    %v473 = vrot.slane %v472, 2
    %v474 = vmax.f32 %v472, %v473
    %v475 = vrot.slane %v474, 1
    %v476 = vmax.f32 %v474, %v475
    %v477 = vmax.f32 %v469, -1e+30
    %v478 = vmax.f32 %v476, -1e+30
    %v479 = vpack.c.bf16 %v477, %v477
    %v480 = vpack.c.bf16 %v478, %v478
    %v481 = vld [vmem:[%s4] sm:$0xf]
    %v482 = vld [vmem:[%s4 + $0x4] sm:$0xf]
    %v483 = vld [vmem:[%s4 + $0x8] sm:$0xf]
    %v484 = vld [vmem:[%s4 + $0xc] sm:$0xf]
    %v485 = vld [vmem:[%s4 + $0x10] sm:$0xf]
    %v486 = vld [vmem:[%s4 + $0x14] sm:$0xf]
    %v487 = vld [vmem:[%s4 + $0x18] sm:$0xf]
    %v488 = vld [vmem:[%s4 + $0x1c] sm:$0xf]
    %v489 = vld [vmem:[%s4 + $0x20] sm:$0xf]
    %v490 = vld [vmem:[%s4 + $0x24] sm:$0xf]
    %v491 = vld [vmem:[%s4 + $0x28] sm:$0xf]
    %v492 = vld [vmem:[%s4 + $0x2c] sm:$0xf]
    %v493 = vld [vmem:[%s4 + $0x30] sm:$0xf]
    %v494 = vld [vmem:[%s4 + $0x34] sm:$0xf]
    %v495 = vld [vmem:[%s4 + $0x38] sm:$0xf]
    %v496 = vld [vmem:[%s4 + $0x3c] sm:$0xf]
    %v497 = vld [vmem:[%s5] sm:$0x1]
    %v499 = vlaneseq
    %v500 = vshrl.u32 %v499, 7
    %v501 = vsub.s32 0, %v500
    %v502 = vrot.slane %v497, %v501
    %v506 = vunpack.c.l.b16 %v479
    %v507 = vunpack.c.l.b16 %v480
    %vm508 = vcmask 1041409
    %v509 = vsel %vm508, %v507, %v506
    %v510 = vpack.c.b16 %v509, %v509
    %v528 = vunpack.c.l.b16 %v481
    %v529 = vunpack.c.l.b16 %v482
    %v530 = vunpack.c.l.b16 %v483
    %v531 = vunpack.c.l.b16 %v484
    %v532 = vunpack.c.l.b16 %v485
    %v533 = vunpack.c.l.b16 %v486
    %v534 = vunpack.c.l.b16 %v487
    %v535 = vunpack.c.l.b16 %v488
    %v536 = vunpack.c.l.b16 %v489
    %v537 = vunpack.c.l.b16 %v490
    %v538 = vunpack.c.l.b16 %v491
    %v539 = vunpack.c.l.b16 %v492
    %v540 = vunpack.c.l.b16 %v493
    %v541 = vunpack.c.l.b16 %v494
    %v542 = vunpack.c.l.b16 %v495
    %v543 = vunpack.c.l.b16 %v496
    %v544 = vpack.c.b16 %v529, %v528
    %v545 = vpack.c.b16 %v531, %v530
    %v546 = vpack.c.b16 %v533, %v532
    %v547 = vpack.c.b16 %v535, %v534
    %v548 = vpack.c.b16 %v537, %v536
    %v549 = vpack.c.b16 %v539, %v538
    %v550 = vpack.c.b16 %v541, %v540
    %v551 = vpack.c.b16 %v543, %v542
    %560 = vmatprep.subr.bf16.mxu0 0
    %561 = vmatpush1.bf16.msra.mxu0 %v544
    %562 = vmatprep.subr.bf16.mxu0 0
    %563 = vmatpush1.bf16.msra.mxu0 %v545
    %564 = vmatprep.subr.bf16.mxu0 0
    %565 = vmatpush1.bf16.msra.mxu0 %v546
    %566 = vmatprep.subr.bf16.mxu0 0
    %567 = vmatpush1.bf16.msra.mxu0 %v547
    %568 = vmatprep.subr.bf16.mxu0 0
    %569 = vmatpush1.bf16.msra.mxu0 %v548
    %570 = vmatprep.subr.bf16.mxu0 0
    %571 = vmatpush1.bf16.msra.mxu0 %v549
    %572 = vmatprep.subr.bf16.mxu0 0
    %573 = vmatpush1.bf16.msra.mxu0 %v550
    %574 = vmatprep.subr.bf16.mxu0 0
    %575 = vmatpush1.bf16.msra.mxu0 %v551
    %576 = vmatprep.subr.bf16.mxu0 0
    %577 = vmatpush1.bf16.msra.mxu0 0
    %578 = vmatprep.subr.bf16.mxu0 0
    %579 = vmatpush1.bf16.msra.mxu0 0
    %580 = vmatprep.subr.bf16.mxu0 0
    %581 = vmatpush1.bf16.msra.mxu0 0
    %582 = vmatprep.subr.bf16.mxu0 0
    %583 = vmatpush1.bf16.msra.mxu0 0
    %584 = vmatprep.subr.bf16.mxu0 0
    %585 = vmatpush1.bf16.msra.mxu0 0
    %586 = vmatprep.subr.bf16.mxu0 0
    %587 = vmatpush1.bf16.msra.mxu0 0
    %588 = vmatprep.subr.bf16.mxu0 0
    %589 = vmatpush1.bf16.msra.mxu0 0
    %590 = vmatprep.subr.bf16.mxu0 0
    %591 = vmatpush1.bf16.msra.mxu0 0
    %592 = vmatprep.mubr.bf16.mxu0 0
    %593 = vmatmul.mubr.bf16.gmra.mrb[0].mxu0 %v510
    %v594 = vpop.f32.mrb[0].mxu0
    %v595 = vadd.f32 %v502, %v594
    %v596 = vpop.f32.mrb[0].mxu0
    %v597 = vpop.f32.mrb[0].mxu0
    %v598 = vpop.f32.mrb[0].mxu0
    %599 = vdwg.mxu0
    %600 = vst [vmem:[#allocation2] sm:$0x3] %v595
    // Predicated region
    $region26: #{text_cnn_forward.1} parent=1 // pred_check
      _
    $region27: #{text_cnn_forward.1} parent=1 // pred_check_branch
      %602 = sbr.rel (0) target = $region29
    $region28: #{text_cnn_forward.1} parent=1 // pred_region
      %s604 = ssub.s32 32, 32
      %605 = vsyncadd [#allocation3], %s604
      %s607 = sshll.u32 [#allocation2], 4
      %s608 = int_to_ptr.vmem [resolvable:$true] %s607
      %610 = dma.vmem_to_hbm [thread:$0]  %s608, 32, %s6, [#allocation3]
    $region29: #{text_cnn_forward.1} parent=1 // pred_fallthru
      _
    // Predicated region
    $region30: #{text_cnn_forward.1} parent=1 // pred_check
      _
    $region31: #{text_cnn_forward.1} parent=1 // pred_check_branch
      %612 = sbr.rel (0) target = $region33
    $region32: #{text_cnn_forward.1} parent=1 // pred_region
      %613 = dma.done [#allocation3], 32
    $region33: #{text_cnn_forward.1} parent=1 // pred_fallthru
      _
    %614 = vsyncpa [#allocation3], 1

</llo_original>
